<compile_context>
chip_gen: v6e
topology: v6e:2x2x1
jax: 0.10.0
libtpu: 0.0.40
codegen_flags: <defaults>
</compile_context>

<pallas_src>
import functools
import math

import jax
import jax.numpy as jnp
from jax.experimental import pallas as pl
from jax.experimental.pallas import tpu as pltpu


def _round_up(v, m):
    return ((v + m - 1) // m) * m


def _cdiv(a, b):
    return (a + b - 1) // b


# F.normalize eps:  x / max(||x||, 1e-12)  ==  x * rsqrt(max(||x||^2, 1e-24))
_EPS_SQ = 1e-24

_PROTO_ROW_TILE = 128  # class-row tile for the one-shot normalization kernel


def _vmem_capacity_bytes():
    """Physical VMEM of the local TPU generation (fallback: v7x-sized 64 MiB)."""
    try:
        info = pltpu.get_tpu_info()
    except Exception:
        return 64 << 20
    for attr in ("vmem_capacity_bytes", "vmem_size_bytes", "vmem_bytes"):
        val = getattr(info, attr, None)
        if val:
            return int(val)
    return 64 << 20


def _default_vmem_budget(cap):
    # v5e/v6e (128 MiB VMEM) -> 96 MiB of tile budget; v7x (64 MiB) -> 32 MiB.
    return max(24 << 20, min(96 << 20, cap - (32 << 20)))


def _sublane_align(*dtypes):
    """Sublane multiple so packed (sub-32-bit) tiles stay unfragmented."""
    return max(8, *(32 // max(1, jnp.dtype(d).itemsize) for d in dtypes))


# ----------------------------------------------------------------------------
# Kernel 1: one-shot prototype L2 normalization (cached across forward calls).
# ----------------------------------------------------------------------------
def _proto_normalize_kernel(p_ref, pn_ref):
    p = p_ref[...].astype(jnp.float32)
    ssq = jnp.sum(p * p, axis=-1, keepdims=True)
    inv = jax.lax.rsqrt(jnp.maximum(ssq, jnp.float32(_EPS_SQ)))  # EUP
    pn_ref[...] = (p * inv).astype(pn_ref.dtype)


def precompute_prototypes(proto, *, matmul_dtype=jnp.bfloat16):
    """pn = F.normalize(proto, dim=-1), padded to (ceil128(C), d_pad), matmul_dtype.

    Run once per weight update and reuse across forward calls (prototypes are
    constant at inference); the temperature is applied in the logits kernel.
    """
    c, d = proto.shape
    c_pad = _round_up(c, 128)
    d_pad = _round_up(d, 128) if d >= 128 else d  # lane-dense contraction dim

    p = proto
    if (c_pad, d_pad) != (c, d):
        p = jnp.pad(p, ((0, c_pad - c), (0, d_pad - d)))

    cap = _vmem_capacity_bytes()
    tile = _PROTO_ROW_TILE
    mm_size = jnp.dtype(matmul_dtype).itemsize
    step_bytes = (2 * tile * d_pad * jnp.dtype(p.dtype).itemsize
                  + 2 * tile * d_pad * mm_size
                  + tile * d_pad * 4)
    vmem_limit = int(min(max(step_bytes + (2 << 20), 16 << 20), cap - (2 << 20)))
    # TODO(synk): tile the feature dim too for extremely large in_dim (>~64K).

    return pl.pallas_call(
        _proto_normalize_kernel,
        out_shape=jax.ShapeDtypeStruct((c_pad, d_pad), matmul_dtype),
        grid_spec=pltpu.PrefetchScalarGridSpec(
            num_scalar_prefetch=0,
            grid=(c_pad // tile,),
            in_specs=[pl.BlockSpec((tile, d_pad), lambda i: (i, 0))],
            out_specs=pl.BlockSpec((tile, d_pad), lambda i: (i, 0)),
        ),
        compiler_params=pltpu.CompilerParams(
            dimension_semantics=("parallel",),
            vmem_limit_bytes=vmem_limit,
        ),
    )(p)


# ----------------------------------------------------------------------------
# Kernel 2: batch/class-tiled cosine logits.
# ----------------------------------------------------------------------------
def _cosine_logits_kernel(temp_ref, x_ref, pn_ref, o_ref, *, compute_dtype,
                          scale_after):
    """One (TN, TC) logits tile: temp * normalize(x_tile) @ pn_tile.T."""
    x_f32 = x_ref[...].astype(jnp.float32)
    ssq = jnp.sum(x_f32 * x_f32, axis=-1, keepdims=True)
    # rsqrt on the EUP; temperature applied here in f32 (pn stays temp-free).
    scale = jax.lax.rsqrt(jnp.maximum(ssq, jnp.float32(_EPS_SQ))) * temp_ref[0]
    if scale_after:
        # d > TC: cheaper to scale the (TN, TC) result than the (TN, d) x tile.
        acc = jax.lax.dot_general(
            x_ref[...].astype(compute_dtype), pn_ref[...],
            dimension_numbers=(((1,), (1,)), ((), ())),
            preferred_element_type=jnp.float32)
        o_ref[...] = (acc * scale).astype(o_ref.dtype)
    else:
        xn = (x_f32 * scale).astype(compute_dtype)
        o_ref[...] = jax.lax.dot_general(
            xn, pn_ref[...],
            dimension_numbers=(((1,), (1,)), ((), ())),
            preferred_element_type=jnp.float32).astype(o_ref.dtype)


def nn_classifier_logits(x, pn, temp, n_classes, *, out_dtype=jnp.float32,
                         block_n=1024, block_c=2048, vmem_budget_bytes=None):
    """x: (N, in_dim), pn: precompute_prototypes(proto) -> (N, n_classes) logits."""
    n, d = x.shape
    c_pn, d_pad = pn.shape
    assert d_pad >= d, "pn feature dim must cover x feature dim"
    assert n_classes <= c_pn, "pn must contain at least n_classes rows"

    cap = _vmem_capacity_bytes()
    budget = (vmem_budget_bytes if vmem_budget_bytes is not None
              else _default_vmem_budget(cap))

    in_size = jnp.dtype(x.dtype).itemsize     # x tiles live at the input dtype
    mm_size = jnp.dtype(pn.dtype).itemsize    # MXU operand dtype (bf16 default)
    out_size = jnp.dtype(out_dtype).itemsize

    # ---- class tiling: lane-dense 128-multiples, shrunk to fit the budget ----
    c_pad0 = _round_up(c_pn, 128)
    tc = _round_up(min(max(block_c, 128), c_pad0), 128)

    def pn_tile_bytes(tc_):
        nbuf = 1 if tc_ >= c_pad0 else 2      # single-buffered when resident
        return nbuf * tc_ * d_pad * mm_size

    while tc > 128 and pn_tile_bytes(tc) > budget // 2:
        tc = max(128, _round_up(tc // 2, 128))
    nc = _cdiv(c_pad0, tc)
    c_pad = nc * tc

    # ---- batch tiling ---------------------------------------------------------
    align = _sublane_align(x.dtype, pn.dtype, out_dtype)  # 16 sublanes for bf16

    def step_bytes(tn_):
        return (2 * tn_ * d_pad * in_size     # x tiles (double-buffered)
                + pn_tile_bytes(tc)           # prototype tile(s)
                + 2 * tn_ * tc * out_size     # logits tiles (double-buffered)
                + tn_ * d_pad * 4             # in-kernel f32 x temporary
                + tn_ * tc * 4)               # f32 matmul accumulator

    tn = _round_up(min(block_n, _round_up(max(n, 1), align)), align)
    while tn > align and step_bytes(tn) > budget:
        tn = max(align, _round_up(tn // 2, align))
    n_pad = _round_up(n, tn)
    # TODO(synk): add a K grid axis with an f32 accumulator for very large in_dim.

    # ---- pad operands (zero rows/cols are exact no-ops for cosine logits) ----
    x_p = x if (n_pad, d_pad) == (n, d) else jnp.pad(x, ((0, n_pad - n), (0, d_pad - d)))
    pn_p = pn if c_pad == c_pn else jnp.pad(pn, ((0, c_pad - c_pn), (0, 0)))
    temp_arr = jnp.asarray(temp, dtype=jnp.float32).reshape((1,))

    # vmem_limit includes headroom for a double-buffered pn even when we request
    # single buffering (over-requesting the scoped limit is harmless).
    vmem_limit = int(min(max(step_bytes(tn) + tc * d_pad * mm_size + (4 << 20),
                             16 << 20),
                         cap - (2 << 20)))

    kernel = functools.partial(_cosine_logits_kernel,
                               compute_dtype=pn_p.dtype,
                               scale_after=d_pad > tc)

    def run(pn_spec):
        out = pl.pallas_call(
            kernel,
            out_shape=jax.ShapeDtypeStruct((n_pad, c_pad), out_dtype),
            grid_spec=pltpu.PrefetchScalarGridSpec(
                num_scalar_prefetch=0,
                grid=(n_pad // tn, nc),
                in_specs=[
                    pl.BlockSpec(memory_space=pltpu.MemorySpace.SMEM),  # temp
                    pl.BlockSpec((tn, d_pad), lambda i, j: (i, 0)),     # x tile
                    pn_spec,                                            # pn tile
                ],
                out_specs=pl.BlockSpec((tn, tc), lambda i, j: (i, j)),
            ),
            compiler_params=pltpu.CompilerParams(
                dimension_semantics=("parallel", "parallel"),
                vmem_limit_bytes=vmem_limit,
            ),
        )(temp_arr, x_p, pn_p)
        return out[:n, :n_classes]

    if nc == 1:
        # Resident prototypes (constant block index): fetched once, so request
        # single buffering to halve their VMEM footprint (matters on v7x's
        # 64 MiB VMEM). Fall back to the default double-buffered spec if this
        # JAX build rejects pipeline_mode=pl.Buffered(1).
        try:
            return run(pl.BlockSpec((tc, d_pad), lambda i, j: (0, 0),
                                    pipeline_mode=pl.Buffered(1)))
        except Exception:
            pass
        return run(pl.BlockSpec((tc, d_pad), lambda i, j: (0, 0)))
    return run(pl.BlockSpec((tc, d_pad), lambda i, j: (j, 0)))


def nn_classifier_forward(x, proto, temp, *, matmul_dtype=jnp.bfloat16,
                          out_dtype=jnp.float32, block_n=1024, block_c=2048,
                          vmem_budget_bytes=None):
    """Single-entry convenience wrapper (prefer caching precompute_prototypes)."""
    # TODO(synk): only metric='cos' of utils.compute_logits is implemented here.
    pn = precompute_prototypes(proto, matmul_dtype=matmul_dtype)
    return nn_classifier_logits(x, pn, temp, proto.shape[0], out_dtype=out_dtype,
                                block_n=block_n, block_c=block_c,
                                vmem_budget_bytes=vmem_budget_bytes)


def init_nn_classifier_params(key, in_dim, n_classes):
    """Deterministic re-creation of NNClassifier.__init__ parameters.

    proto: kaiming_uniform_(a=sqrt(5)) => uniform(-1/sqrt(fan_in), 1/sqrt(fan_in))
    temp : 10.0 (metric='cos', temp=None default -> learnable Parameter(10.0))
    """
    bound = 1.0 / math.sqrt(in_dim)
    proto = jax.random.uniform(
        key, (n_classes, in_dim), dtype=jnp.float32, minval=-bound, maxval=bound
    )
    temp = jnp.float32(10.0)
    return proto, temp


if __name__ == "__main__":
    key = jax.random.PRNGKey(0)
    k1, k2, k3, k4 = jax.random.split(key, 4)

    # Plain-JAX reference with the exact compute_logits('cos') semantics.
    def ref(x, proto, temp):
        xn = x / jnp.maximum(jnp.linalg.norm(x, axis=-1, keepdims=True), 1e-12)
        pn = proto / jnp.maximum(jnp.linalg.norm(proto, axis=-1, keepdims=True), 1e-12)
        return (xn @ pn.T) * temp

    # --- test 1: small module-consistent shapes, cached-pn API, both dtypes ---
    batch, in_dim, n_classes = 8, 32, 4
    proto, temp = init_nn_classifier_params(k1, in_dim, n_classes)
    x = jax.random.normal(k2, (batch, in_dim), dtype=jnp.float32)
    expected = ref(x, proto, temp)

    pn_bf16 = precompute_prototypes(proto)              # cached per weight update
    logits_bf16 = nn_classifier_logits(x, pn_bf16, temp, n_classes)
    logits_bf16_b = nn_classifier_logits(2.0 * x, pn_bf16, temp, n_classes)  # reuse
    logits_f32 = nn_classifier_forward(x, proto, temp, matmul_dtype=jnp.float32)
    jax.block_until_ready((logits_bf16, logits_bf16_b, logits_f32))
    assert logits_bf16.shape == (batch, n_classes)
    assert jnp.allclose(logits_f32, expected, atol=2e-3, rtol=2e-3)
    assert jnp.allclose(logits_bf16, expected, atol=1e-1, rtol=2e-2)
    # cosine is scale-invariant in x, so the cached-pn second call must match too
    assert jnp.allclose(logits_bf16_b, expected, atol=1e-1, rtol=2e-2)

    # --- test 2: exercises N grid, C grid, d padding, class/batch padding -----
    batch2, in_dim2, n_classes2 = 300, 160, 200
    proto2, temp2 = init_nn_classifier_params(k3, in_dim2, n_classes2)
    x2 = jax.random.normal(k4, (batch2, in_dim2), dtype=jnp.float32)
    expected2 = ref(x2, proto2, temp2)

    logits2_bf16 = nn_classifier_forward(x2, proto2, temp2, block_n=128, block_c=128)
    logits2_f32 = nn_classifier_forward(x2, proto2, temp2, matmul_dtype=jnp.float32,
                                        block_n=128, block_c=128)
    jax.block_until_ready((logits2_bf16, logits2_f32))
    assert logits2_bf16.shape == (batch2, n_classes2)
    assert jnp.allclose(logits2_f32, expected2, atol=2e-3, rtol=2e-3)
    assert jnp.allclose(logits2_bf16, expected2, atol=1e-1, rtol=2e-2)

    print("KERNEL_OK")
</pallas_src>

<mosaic_0001>
module attributes {stable_mosaic.version = 11 : i64} {
  func.func @_proto_normalize_kernel(%arg0: i32, %arg1: memref<128x32xf32, #tpu.memory_space<vmem>>, %arg2: memref<128x32xbf16, #tpu.memory_space<vmem>>) attributes {dimension_semantics = [#tpu.dimension_semantics<parallel>], iteration_bounds = array<i64: 1>, scalar_prefetch = 0 : i64, scratch_operands = 0 : i64, tpu.core_type = #tpu.core_type<tc>, window_params = [{transform_indices = @transform_0, window_bounds = array<i64: 128, 32>}, {transform_indices = @transform_1, window_bounds = array<i64: 128, 32>}]} {
    %c0 = arith.constant 0 : index
    %c0_0 = arith.constant 0 : index
    %0 = vector.load %arg1[%c0, %c0_0] : memref<128x32xf32, #tpu.memory_space<vmem>>, vector<128x32xf32>
    %1 = arith.mulf %0, %0 : vector<128x32xf32>
    %cst = arith.constant dense<0.000000e+00> : vector<128xf32>
    %2 = vector.multi_reduction <add>, %1, %cst [1] : vector<128x32xf32> to vector<128xf32>
    %3 = vector.shape_cast %2 : vector<128xf32> to vector<128x1xf32>
    %cst_1 = arith.constant 1.000000e-24 : f32
    %4 = vector.broadcast %cst_1 : f32 to vector<128x1xf32>
    %5 = arith.maximumf %3, %4 : vector<128x1xf32>
    %6 = math.rsqrt %5 : vector<128x1xf32>
    %7 = vector.broadcast %6 : vector<128x1xf32> to vector<128x32xf32>
    %8 = arith.mulf %0, %7 : vector<128x32xf32>
    %9 = arith.truncf %8 : vector<128x32xf32> to vector<128x32xbf16>
    %c0_2 = arith.constant 0 : index
    %c0_3 = arith.constant 0 : index
    %10 = vector.load %arg2[%c0_2, %c0_3] : memref<128x32xbf16, #tpu.memory_space<vmem>>, vector<128x32xbf16>
    tpu.vector_store %arg2[%c0_2, %c0_3], %9 {strides = array<i32>} : memref<128x32xbf16, #tpu.memory_space<vmem>>, vector<128x32xbf16>,
    return
  }
  func.func @transform_0(%arg0: i32) -> (i32, i32) {
    %c0_i32 = arith.constant 0 : i32
    %c0_i32_0 = arith.constant 0 : i32
    return %arg0, %c0_i32 : i32, i32
  }
  func.func @transform_1(%arg0: i32) -> (i32, i32) {
    %c0_i32 = arith.constant 0 : i32
    %c0_i32_0 = arith.constant 0 : i32
    return %arg0, %c0_i32 : i32, i32
  }
}

</mosaic_0001>

<llo_original>
// kernel: tpu_custom_call.1
$region0: #{tpu_custom_call.1}
  #allocation0 [shape = 'u32[]', space=smem, size = 0x4, offset = 0x4, fixed_abs, tag = 'smem constant byte address 0x4 - core index']
  #allocation1 [shape = 'u32[144,128]{1,0:T(1,128)}', space=vmem, size = 0x12000, scoped, tag = 'internal scratch']
  %s0 = inlined_call_operand.vmem [shape: f32[128,32], index: 0, kind: input, shape index: {}]
  %s1 = inlined_call_operand.vmem [shape: bf16[128,32], index: 1, kind: output, shape index: {}]
  %s2 = sld [smem:[#allocation0]]
  $region14: #{tpu_custom_call.1} parent=0
    _
  %s4 = ssub.s32 1, %s2
  %s5 = scalar_select 0, %s4, %s2
  // Predicated region
  $region2: #{tpu_custom_call.1} parent=0 // pred_check
    _
  $region3: #{tpu_custom_call.1} parent=0 // pred_check_branch
    %7 = sbr.rel (0) target = $region5
  $region4: #{tpu_custom_call.1} parent=0 // pred_region
    _
  $region5: #{tpu_custom_call.1} parent=0 // pred_fallthru
    _
  %v8 = vld [vmem:[%s0] sm:$0xff]
  %v9 = vld [vmem:[%s0 + $0x8] sm:$0xff]
  %v10 = vld [vmem:[%s0 + $0x10] sm:$0xff]
  %v11 = vld [vmem:[%s0 + $0x18] sm:$0xff]
  %v12 = vld [vmem:[%s0 + $0x20] sm:$0xff]
  %v13 = vld [vmem:[%s0 + $0x28] sm:$0xff]
  %v14 = vld [vmem:[%s0 + $0x30] sm:$0xff]
  %v15 = vld [vmem:[%s0 + $0x38] sm:$0xff]
  %v16 = vld [vmem:[%s0 + $0x40] sm:$0xff]
  %v17 = vld [vmem:[%s0 + $0x48] sm:$0xff]
  %v18 = vld [vmem:[%s0 + $0x50] sm:$0xff]
  %v19 = vld [vmem:[%s0 + $0x58] sm:$0xff]
  %v20 = vld [vmem:[%s0 + $0x60] sm:$0xff]
  %v21 = vld [vmem:[%s0 + $0x68] sm:$0xff]
  %v22 = vld [vmem:[%s0 + $0x70] sm:$0xff]
  %v23 = vld [vmem:[%s0 + $0x78] sm:$0xff]
  %v24 = vmul.f32 %v8, %v8
  %v25 = vmul.f32 %v9, %v9
  %v26 = vmul.f32 %v10, %v10
  %v27 = vmul.f32 %v11, %v11
  %v28 = vmul.f32 %v12, %v12
  %v29 = vmul.f32 %v13, %v13
  %v30 = vmul.f32 %v14, %v14
  %v31 = vmul.f32 %v15, %v15
  %v32 = vmul.f32 %v16, %v16
  %v33 = vmul.f32 %v17, %v17
  %v34 = vmul.f32 %v18, %v18
  %v35 = vmul.f32 %v19, %v19
  %v36 = vmul.f32 %v20, %v20
  %v37 = vmul.f32 %v21, %v21
  %v38 = vmul.f32 %v22, %v22
  %v39 = vmul.f32 %v23, %v23
  %vm40 = vcmask 261120
  %v41 = vsel %vm40, %v24, 0.0
  %42 = vadd.xlane.f32.xlu0 %v41
  %v43 = vpop.xlane.xlu0 %42
  %v44 = vsel %vm40, %v25, 0.0
  %45 = vadd.xlane.f32.xlu0 %v44
  %v46 = vpop.xlane.xlu0 %45
  %v47 = vsel %vm40, %v26, 0.0
  %48 = vadd.xlane.f32.xlu0 %v47
  %v49 = vpop.xlane.xlu0 %48
  %v50 = vsel %vm40, %v27, 0.0
  %51 = vadd.xlane.f32.xlu0 %v50
  %v52 = vpop.xlane.xlu0 %51
  %v53 = vsel %vm40, %v28, 0.0
  %54 = vadd.xlane.f32.xlu0 %v53
  %v55 = vpop.xlane.xlu0 %54
  %v56 = vsel %vm40, %v29, 0.0
  %57 = vadd.xlane.f32.xlu0 %v56
  %v58 = vpop.xlane.xlu0 %57
  %v59 = vsel %vm40, %v30, 0.0
  %60 = vadd.xlane.f32.xlu0 %v59
  %v61 = vpop.xlane.xlu0 %60
  %v62 = vsel %vm40, %v31, 0.0
  %63 = vadd.xlane.f32.xlu0 %v62
  %v64 = vpop.xlane.xlu0 %63
  %v65 = vsel %vm40, %v32, 0.0
  %66 = vadd.xlane.f32.xlu0 %v65
  %v67 = vpop.xlane.xlu0 %66
  %v68 = vsel %vm40, %v33, 0.0
  %69 = vadd.xlane.f32.xlu0 %v68
  %v70 = vpop.xlane.xlu0 %69
  %v71 = vsel %vm40, %v34, 0.0
  %72 = vadd.xlane.f32.xlu0 %v71
  %v73 = vpop.xlane.xlu0 %72
  %v74 = vsel %vm40, %v35, 0.0
  %75 = vadd.xlane.f32.xlu0 %v74
  %v76 = vpop.xlane.xlu0 %75
  %v77 = vsel %vm40, %v36, 0.0
  %78 = vadd.xlane.f32.xlu0 %v77
  %v79 = vpop.xlane.xlu0 %78
  %v80 = vsel %vm40, %v37, 0.0
  %81 = vadd.xlane.f32.xlu0 %v80
  %v82 = vpop.xlane.xlu0 %81
  %v83 = vsel %vm40, %v38, 0.0
  %84 = vadd.xlane.f32.xlu0 %v83
  %v85 = vpop.xlane.xlu0 %84
  %v86 = vsel %vm40, %v39, 0.0
  %87 = vadd.xlane.f32.xlu0 %v86
  %v88 = vpop.xlane.xlu0 %87
  %v89 = vmax.f32 %v43, 1e-24
  %v90 = vmax.f32 %v46, 1e-24
  %v91 = vmax.f32 %v49, 1e-24
  %v92 = vmax.f32 %v52, 1e-24
  %v93 = vmax.f32 %v55, 1e-24
  %v94 = vmax.f32 %v58, 1e-24
  %v95 = vmax.f32 %v61, 1e-24
  %v96 = vmax.f32 %v64, 1e-24
  %v97 = vmax.f32 %v67, 1e-24
  %v98 = vmax.f32 %v70, 1e-24
  %v99 = vmax.f32 %v73, 1e-24
  %v100 = vmax.f32 %v76, 1e-24
  %v101 = vmax.f32 %v79, 1e-24
  %v102 = vmax.f32 %v82, 1e-24
  %v103 = vmax.f32 %v85, 1e-24
  %v104 = vmax.f32 %v88, 1e-24
  %v105 = vrsqrt.pop %v89
  %v106 = vrsqrt.pop %v90
  %v107 = vrsqrt.pop %v91
  %v108 = vrsqrt.pop %v92
  %v109 = vrsqrt.pop %v93
  %v110 = vrsqrt.pop %v94
  %v111 = vrsqrt.pop %v95
  %v112 = vrsqrt.pop %v96
  %v113 = vrsqrt.pop %v97
  %v114 = vrsqrt.pop %v98
  %v115 = vrsqrt.pop %v99
  %v116 = vrsqrt.pop %v100
  %v117 = vrsqrt.pop %v101
  %v118 = vrsqrt.pop %v102
  %v119 = vrsqrt.pop %v103
  %v120 = vrsqrt.pop %v104
  %v121 = vmul.f32 %v8, %v105
  %v122 = vmul.f32 %v9, %v106
  %v123 = vmul.f32 %v10, %v107
  %v124 = vmul.f32 %v11, %v108
  %v125 = vmul.f32 %v12, %v109
  %v126 = vmul.f32 %v13, %v110
  %v127 = vmul.f32 %v14, %v111
  %v128 = vmul.f32 %v15, %v112
  %v129 = vmul.f32 %v16, %v113
  %v130 = vmul.f32 %v17, %v114
  %v131 = vmul.f32 %v18, %v115
  %v132 = vmul.f32 %v19, %v116
  %v133 = vmul.f32 %v20, %v117
  %v134 = vmul.f32 %v21, %v118
  %v135 = vmul.f32 %v22, %v119
  %v136 = vmul.f32 %v23, %v120
  %v137 = vpack.c.bf16 %v122, %v121
  %v138 = vpack.c.bf16 %v124, %v123
  %v139 = vpack.c.bf16 %v126, %v125
  %v140 = vpack.c.bf16 %v128, %v127
  %v141 = vpack.c.bf16 %v130, %v129
  %v142 = vpack.c.bf16 %v132, %v131
  %v143 = vpack.c.bf16 %v134, %v133
  %v144 = vpack.c.bf16 %v136, %v135
  %v153 = vunpack.c.l.b16 %v137
  %v154 = vunpack.c.h.b16 %v137
  %v155 = vunpack.c.l.b16 %v138
  %v156 = vunpack.c.h.b16 %v138
  %v157 = vunpack.c.l.b16 %v139
  %v158 = vunpack.c.h.b16 %v139
  %v159 = vunpack.c.l.b16 %v140
  %v160 = vunpack.c.h.b16 %v140
  %v161 = vunpack.c.l.b16 %v141
  %v162 = vunpack.c.h.b16 %v141
  %v163 = vunpack.c.l.b16 %v142
  %v164 = vunpack.c.h.b16 %v142
  %v165 = vunpack.c.l.b16 %v143
  %v166 = vunpack.c.h.b16 %v143
  %v167 = vunpack.c.l.b16 %v144
  %v168 = vunpack.c.h.b16 %v144
  %v169 = vpack.c.b16 %v153, %v153
  %v170 = vpack.c.b16 %v154, %v154
  %v171 = vpack.c.b16 %v155, %v155
  %v172 = vpack.c.b16 %v156, %v156
  %v173 = vpack.c.b16 %v157, %v157
  %v174 = vpack.c.b16 %v158, %v158
  %v175 = vpack.c.b16 %v159, %v159
  %v176 = vpack.c.b16 %v160, %v160
  %v177 = vpack.c.b16 %v161, %v161
  %v178 = vpack.c.b16 %v162, %v162
  %v179 = vpack.c.b16 %v163, %v163
  %v180 = vpack.c.b16 %v164, %v164
  %v181 = vpack.c.b16 %v165, %v165
  %v182 = vpack.c.b16 %v166, %v166
  %v183 = vpack.c.b16 %v167, %v167
  %v184 = vpack.c.b16 %v168, %v168
  %vm201 = vcmask 257024
  %202 = vst.msk [vmem:[%s1] sm:$0xf] %vm201, %v169
  %203 = vst.msk [vmem:[%s1 + $0x4] sm:$0xf] %vm201, %v170
  %204 = vst.msk [vmem:[%s1 + $0x8] sm:$0xf] %vm201, %v171
  %205 = vst.msk [vmem:[%s1 + $0xc] sm:$0xf] %vm201, %v172
  %206 = vst.msk [vmem:[%s1 + $0x10] sm:$0xf] %vm201, %v173
  %207 = vst.msk [vmem:[%s1 + $0x14] sm:$0xf] %vm201, %v174
  %208 = vst.msk [vmem:[%s1 + $0x18] sm:$0xf] %vm201, %v175
  %209 = vst.msk [vmem:[%s1 + $0x1c] sm:$0xf] %vm201, %v176
  %210 = vst.msk [vmem:[%s1 + $0x20] sm:$0xf] %vm201, %v177
  %211 = vst.msk [vmem:[%s1 + $0x24] sm:$0xf] %vm201, %v178
  %212 = vst.msk [vmem:[%s1 + $0x28] sm:$0xf] %vm201, %v179
  %213 = vst.msk [vmem:[%s1 + $0x2c] sm:$0xf] %vm201, %v180
  %214 = vst.msk [vmem:[%s1 + $0x30] sm:$0xf] %vm201, %v181
  %215 = vst.msk [vmem:[%s1 + $0x34] sm:$0xf] %vm201, %v182
  %216 = vst.msk [vmem:[%s1 + $0x38] sm:$0xf] %vm201, %v183
  %217 = vst.msk [vmem:[%s1 + $0x3c] sm:$0xf] %vm201, %v184
  // Predicated region
  $region6: #{tpu_custom_call.1} parent=0 // pred_check
    _
  $region7: #{tpu_custom_call.1} parent=0 // pred_check_branch
    %219 = sbr.rel (0) target = $region9
  $region8: #{tpu_custom_call.1} parent=0 // pred_region
    _
  $region9: #{tpu_custom_call.1} parent=0 // pred_fallthru
    _
  // Predicated region
  $region10: #{tpu_custom_call.1} parent=0 // pred_check
    _
  $region11: #{tpu_custom_call.1} parent=0 // pred_check_branch
    %221 = sbr.rel (0) target = $region13
  $region12: #{tpu_custom_call.1} parent=0 // pred_region
    _
  $region13: #{tpu_custom_call.1} parent=0 // pred_fallthru
    _

</llo_original>
